<compile_context>
chip_gen: v7x
topology: tpu7x:2x2x1
jax: 0.10.0
libtpu: 0.0.40
codegen_flags: <defaults>
</compile_context>

<pallas_src>
import jax
import jax.numpy as jnp
from jax.experimental import pallas as pl
from jax.experimental.pallas import tpu as pltpu

BN_EPS = 1e-5
KSIZE = 7
PAD = 3


# ------------------------------ Pallas kernel --------------------------------
def _spatial_attention_kernel(x_ref, w_ref, shift_ref, o_ref):
    """Fused ChannelPool + 7x7 conv (+bias+BN) + sigmoid for a batch block.

    x_ref    : (B, C, H*W)    VMEM  batch block, channels on sublanes
    w_ref    : (2*H*W, H*W)   VMEM  bf16 stacked Toeplitz weights (max | mean)
    shift_ref: (1,)           SMEM  fused conv-bias + BatchNorm shift (scalar)
    o_ref    : (B, H*W)       VMEM  sigmoid attention map, lane/sublane dense
    """
    x = x_ref[...]                                  # (B, C, HW) f32
    mx = jnp.max(x, axis=1)                         # (B, HW)  ChannelPool max
    mn = jnp.mean(x, axis=1)                        # (B, HW)  ChannelPool mean
    lhs = jnp.concatenate([mx, mn], axis=-1)        # (B, 2*HW)

    b, k = lhs.shape
    b_pad = ((b + 7) // 8) * 8
    if b_pad != b:                                  # static: align MXU sublanes
        lhs = jnp.concatenate(
            [lhs, jnp.zeros((b_pad - b, k), lhs.dtype)], axis=0)

    # Single fused MXU matmul: (B_pad, 2*HW) @ (2*HW, HW), bf16 in / f32 acc.
    y = jnp.dot(lhs.astype(jnp.bfloat16), w_ref[...],
                preferred_element_type=jnp.float32)

    # Fused conv-bias + BatchNorm shift, then sigmoid.  Dense store.
    o_ref[...] = jax.nn.sigmoid(y[:b, :] + shift_ref[0])


# ------------------------------ wrapper ---------------------------------------
def _conv_toeplitz(weight_2d, H, W):
    """Build T of shape (H*W, H*W) with row = INPUT pixel (h, w) and
    col = OUTPUT pixel (h', w'):
         T[h*W + w, h'*W + w'] = weight_2d[h - h' + 3, w - w' + 3]
    when the offset lies inside the 7x7 window (zero otherwise), so that
         (pooled.reshape(1, H*W) @ T).reshape(H, W)
           == conv2d(pooled, weight_2d, padding=3)          (zero padding)."""
    hh = jnp.arange(H)
    ww = jnp.arange(W)
    dy = hh[:, None] - hh[None, :] + PAD                 # (H, H): ky = h - h' + 3
    dx = ww[:, None] - ww[None, :] + PAD                 # (W, W): kx = w - w' + 3
    ok = ((dy >= 0) & (dy < KSIZE))[:, None, :, None] & \
         ((dx >= 0) & (dx < KSIZE))[None, :, None, :]    # (H, W, H, W)
    dyc = jnp.clip(dy, 0, KSIZE - 1)
    dxc = jnp.clip(dx, 0, KSIZE - 1)
    t = weight_2d[dyc[:, None, :, None], dxc[None, :, None, :]]   # (H, W, H, W)
    t = jnp.where(ok, t, 0.0)
    return t.reshape(H * W, H * W)


def _choose_batch_block(n):
    """Rows per grid step: whole batch if tiny, else a multiple of 8 capped at
    128 with at least 2 grid steps (keeps v7x megacore sharding alive)."""
    if n <= 8:
        return n
    half = -(-n // 2)                       # ceil(n / 2): >= 2 grid steps
    return min(128, -(-half // 8) * 8)      # round up to sublane multiple


def spatial_attention_forward(params, x):
    """x: (N, C, H, W) float32 (NCHW, like PyTorch).  Returns scale (N, 1, H, W)."""
    N, C, H, W = x.shape
    HW = H * W

    # Fold inference-mode BatchNorm + conv bias into the weights and one shift.
    bn_scale = params["bn_gamma"] / jnp.sqrt(params["bn_var"] + BN_EPS)   # (1,)
    bn_shift = params["bn_beta"] - params["bn_mean"] * bn_scale           # (1,)
    w_fused = params["w_spatial"] * bn_scale[0]                           # (2, 7, 7)
    shift = (params["b_spatial"] * bn_scale + bn_shift).astype(jnp.float32)  # (1,)

    # Stack the two Toeplitz matrices along the contraction axis (max on top,
    # mean below) and cast to bf16 (halves weight DMA/VMEM, ~2-3x MXU rate).
    t_max = _conv_toeplitz(w_fused[0], H, W)     # ChannelPool channel 0 = max
    t_mean = _conv_toeplitz(w_fused[1], H, W)    # ChannelPool channel 1 = mean
    w_stacked = jnp.concatenate([t_max, t_mean], axis=0).astype(jnp.bfloat16)

    # Batch blocking: B rows per grid step, zero-pad N to a whole number of
    # blocks so every block (and every pooled LHS row) is well defined.
    B = _choose_batch_block(N)
    grid_n = -(-N // B)
    N_pad = grid_n * B
    x3 = x.reshape(N, C, HW)                     # free reshape, no transpose
    if N_pad != N:
        x3 = jnp.pad(x3, ((0, N_pad - N), (0, 0), (0, 0)))

    # Only set an explicit VMEM limit when the footprint approaches the
    # default scoped limit (large feature maps); never triggered at d3s sizes.
    est_vmem = (w_stacked.size * 2            # single-buffered weight (bf16)
                + 2 * B * C * HW * 4          # double-buffered input blocks
                + 2 * B * HW * 4)             # double-buffered output blocks
    vmem_limit = None
    if est_vmem > (24 << 20):
        vmem_limit = int(min(2 * est_vmem + (8 << 20), 112 << 20))

    out = pl.pallas_call(
        _spatial_attention_kernel,
        out_shape=jax.ShapeDtypeStruct((N_pad, HW), jnp.float32),
        grid=(grid_n,),
        in_specs=[
            pl.BlockSpec((B, C, HW), lambda i: (i, 0, 0)),
            # Constant conv weight: whole-array VMEM residency, single copy,
            # no per-step re-DMA / double buffering.
            pl.BlockSpec(memory_space=pltpu.MemorySpace.VMEM),
            pl.BlockSpec(memory_space=pltpu.MemorySpace.SMEM),
        ],
        out_specs=pl.BlockSpec((B, HW), lambda i: (i, 0)),
        compiler_params=pltpu.CompilerParams(
            dimension_semantics=("parallel",),
            vmem_limit_bytes=vmem_limit),
    )(x3, w_stacked, shift)

    return out[:N].reshape(N, 1, H, W)


# ------------------------------ pure-JAX reference ----------------------------
def spatial_attention_reference(params, x):
    """Reference with the same semantics as the PyTorch module (inference BN)."""
    mx = jnp.max(x, axis=1, keepdims=True)
    mn = jnp.mean(x, axis=1, keepdims=True)
    xc = jnp.concatenate([mx, mn], axis=1)                        # (N, 2, H, W)
    w = params["w_spatial"][None]                                 # (1, 2, 7, 7) OIHW
    y = jax.lax.conv_general_dilated(
        xc, w, window_strides=(1, 1), padding=((PAD, PAD), (PAD, PAD)),
        dimension_numbers=("NCHW", "OIHW", "NCHW"))
    y = y + params["b_spatial"].reshape(1, 1, 1, 1)
    s = params["bn_gamma"] / jnp.sqrt(params["bn_var"] + BN_EPS)
    t = params["bn_beta"] - params["bn_mean"] * s
    return jax.nn.sigmoid(y * s.reshape(1, 1, 1, 1) + t.reshape(1, 1, 1, 1))


def init_params(key):
    kw, kb = jax.random.split(key, 2)
    fan_in = 2 * KSIZE * KSIZE
    return {
        # Conv2d(2, 1, 7, padding=3, bias=True) weight, out-channel squeezed:
        # channel 0 multiplies the max map, channel 1 the mean map.
        "w_spatial": jax.random.normal(kw, (2, KSIZE, KSIZE), jnp.float32)
        * (1.0 / fan_in) ** 0.5,
        "b_spatial": jax.random.normal(kb, (1,), jnp.float32) * 0.1,
        # BatchNorm2d(1) inference-mode parameters (PyTorch defaults).
        "bn_gamma": jnp.ones((1,), jnp.float32),
        "bn_beta": jnp.zeros((1,), jnp.float32),
        "bn_mean": jnp.zeros((1,), jnp.float32),
        "bn_var": jnp.ones((1,), jnp.float32),
    }


if __name__ == "__main__":
    key = jax.random.PRNGKey(0)
    kp, kx = jax.random.split(key, 2)

    N, C, H, W = 2, 32, 16, 16
    params = init_params(kp)
    x = jax.random.normal(kx, (N, C, H, W), jnp.float32)

    scale = jax.jit(spatial_attention_forward)(params, x)
    scale = jax.block_until_ready(scale)

    assert scale.shape == (N, 1, H, W), scale.shape
    assert bool(jnp.all(jnp.isfinite(scale)))

    # Semantic check against the pure-JAX reference (tolerance accommodates the
    # bf16 MXU weight/activation cast with f32 accumulation).
    ref = spatial_attention_reference(params, x)
    max_err = float(jnp.max(jnp.abs(scale - ref)))
    assert max_err < 2e-2, f"max |kernel - reference| = {max_err}"

    print("KERNEL_OK")
</pallas_src>

<mosaic_0001>
module attributes {stable_mosaic.version = 11 : i64} {
  func.func @_spatial_attention_kernel(%arg0: i32, %arg1: memref<2x32x256xf32, #tpu.memory_space<vmem>>, %arg2: memref<512x256xbf16, #tpu.memory_space<vmem>>, %arg3: memref<1xf32, #tpu.memory_space<smem>>, %arg4: memref<2x256xf32, #tpu.memory_space<vmem>>) attributes {dimension_semantics = [#tpu.dimension_semantics<parallel>], iteration_bounds = array<i64: 1>, scalar_prefetch = 0 : i64, scratch_operands = 0 : i64, tpu.core_type = #tpu.core_type<tc>, window_params = [{transform_indices = @transform_0, window_bounds = array<i64: 2, 32, 256>}, {pipeline_mode = #tpu.pipeline_mode<synchronous>, transform_indices = @transform_1, window_bounds = array<i64: 512, 256>}, {transform_indices = @transform_2, window_bounds = array<i64: 1>}, {transform_indices = @transform_3, window_bounds = array<i64: 2, 256>}]} {
    %c0 = arith.constant 0 : index
    %c0_0 = arith.constant 0 : index
    %c0_1 = arith.constant 0 : index
    %0 = vector.load %arg1[%c0, %c0_0, %c0_1] : memref<2x32x256xf32, #tpu.memory_space<vmem>>, vector<2x32x256xf32>
    %cst = arith.constant dense<0xFF800000> : vector<2x256xf32>
    %1 = vector.multi_reduction <maximumf>, %0, %cst [1] : vector<2x32x256xf32> to vector<2x256xf32>
    %cst_2 = arith.constant dense<0.000000e+00> : vector<2x256xf32>
    %2 = vector.multi_reduction <add>, %0, %cst_2 [1] : vector<2x32x256xf32> to vector<2x256xf32>
    %cst_3 = arith.constant 3.200000e+01 : f32
    %3 = vector.broadcast %cst_3 : f32 to vector<2x256xf32>
    %4 = arith.divf %2, %3 : vector<2x256xf32>
    %5 = tpu.concatenate %1, %4 in 1 : vector<2x256xf32>, vector<2x256xf32> -> vector<2x512xf32>
    %cst_4 = arith.constant 0.000000e+00 : f32
    %6 = vector.broadcast %cst_4 : f32 to vector<6x512xf32>
    %7 = tpu.concatenate %5, %6 in 0 : vector<2x512xf32>, vector<6x512xf32> -> vector<8x512xf32>
    %8 = arith.truncf %7 : vector<8x512xf32> to vector<8x512xbf16>
    %c0_5 = arith.constant 0 : index
    %c0_6 = arith.constant 0 : index
    %9 = vector.load %arg2[%c0_5, %c0_6] : memref<512x256xbf16, #tpu.memory_space<vmem>>, vector<512x256xbf16>
    %cst_7 = arith.constant dense<0.000000e+00> : vector<8x256xf32>
    %10 = tpu.matmul %8, %9, %cst_7 {dimension_numbers = #tpu.dot_dimension_numbers<[1], [0], [0], [1], [0, 0, 1, 1], [], []>} : vector<8x512xbf16>, vector<512x256xbf16>, vector<8x256xf32> -> vector<8x256xf32>
    %11 = vector.extract_strided_slice %10 {offsets = [0, 0], sizes = [2, 256], strides = [1, 1]} : vector<8x256xf32> to vector<2x256xf32>
    %c0_8 = arith.constant 0 : index
    %12 = memref.load %arg3[%c0_8] : memref<1xf32, #tpu.memory_space<smem>>
    %13 = vector.broadcast %12 : f32 to vector<2x256xf32>
    %14 = arith.addf %11, %13 : vector<2x256xf32>
    %15 = arith.negf %14 : vector<2x256xf32>
    %16 = math.exp %15 : vector<2x256xf32>
    %cst_9 = arith.constant 1.000000e+00 : f32
    %17 = vector.broadcast %cst_9 : f32 to vector<2x256xf32>
    %18 = arith.addf %17, %16 : vector<2x256xf32>
    %19 = arith.divf %17, %18 : vector<2x256xf32>
    %c0_10 = arith.constant 0 : index
    %c0_11 = arith.constant 0 : index
    %20 = vector.load %arg4[%c0_10, %c0_11] : memref<2x256xf32, #tpu.memory_space<vmem>>, vector<2x256xf32>
    tpu.vector_store %arg4[%c0_10, %c0_11], %19 {strides = array<i32>} : memref<2x256xf32, #tpu.memory_space<vmem>>, vector<2x256xf32>,
    return
  }
  func.func @transform_0(%arg0: i32) -> (i32, i32, i32) {
    %c0_i32 = arith.constant 0 : i32
    %c0_i32_0 = arith.constant 0 : i32
    %c0_i32_1 = arith.constant 0 : i32
    return %arg0, %c0_i32, %c0_i32_0 : i32, i32, i32
  }
  func.func @transform_1(%arg0: i32) -> (i32, i32) {
    %c0_i32 = arith.constant 0 : i32
    %c0_i32_0 = arith.constant 0 : i32
    %c0_i32_1 = arith.constant 0 : i32
    return %c0_i32, %c0_i32_0 : i32, i32
  }
  func.func @transform_2(%arg0: i32) -> i32 {
    %c0_i32 = arith.constant 0 : i32
    %c0_i32_0 = arith.constant 0 : i32
    return %c0_i32 : i32
  }
  func.func @transform_3(%arg0: i32) -> (i32, i32) {
    %c0_i32 = arith.constant 0 : i32
    %c0_i32_0 = arith.constant 0 : i32
    return %arg0, %c0_i32 : i32, i32
  }
}

</mosaic_0001>

<llo_original>
// kernel: spatial_attention_forward.1
$region0: #{spatial_attention_forward.1}
  #allocation0 [shape = 'u32[]', space=smem, size = 0x4, offset = 0x4, fixed_abs, tag = 'smem constant byte address 0x4 - core index']
  #allocation1 [shape = 'u32[144,128]{1,0:T(1,128)}', space=vmem, size = 0x12000, scoped, tag = 'internal scratch']
  #allocation2 [shape = 'f32[1]{0:T(128)S(6)}', space=smem, size = 0x200, scoped, tag = 'scoped memory for spatial_attention_forward.1']
  %s0 = inlined_call_operand.vmem [shape: f32[2,32,256], index: 0, kind: input, shape index: {}]
  %s1 = inlined_call_operand.vmem [shape: bf16[512,256], index: 1, kind: input, shape index: {}]
  %s2 = inlined_call_operand.<no memory space> [shape: f32[1], index: 2, kind: input, shape index: {}]
  %s3 = inlined_call_operand.vmem [shape: f32[2,256], index: 3, kind: output, shape index: {}]
  %s4 = sld [smem:[#allocation0]]
  $region22: #{spatial_attention_forward.1} parent=0
    _
  %s6 = ssub.s32 1, %s4
  %s7 = scalar_select 0, %s6, %s4
  %8 = sst [smem:[#allocation2]] %s2
  // Predicated region
  $region2: #{spatial_attention_forward.1} parent=0 // pred_check
    _
  $region3: #{spatial_attention_forward.1} parent=0 // pred_check_branch
    %10 = sbr.rel (0) target = $region5
  $region4: #{spatial_attention_forward.1} parent=0 // pred_region
    _
  $region5: #{spatial_attention_forward.1} parent=0 // pred_fallthru
    _
  // Predicated region
  $region6: #{spatial_attention_forward.1} parent=0 // pred_check
    _
  $region7: #{spatial_attention_forward.1} parent=0 // pred_check_branch
    %12 = sbr.rel (0) target = $region9
  $region8: #{spatial_attention_forward.1} parent=0 // pred_region
    _
  $region9: #{spatial_attention_forward.1} parent=0 // pred_fallthru
    _
  // Predicated region
  $region10: #{spatial_attention_forward.1} parent=0 // pred_check
    _
  $region11: #{spatial_attention_forward.1} parent=0 // pred_check_branch
    %14 = sbr.rel (0) target = $region13
  $region12: #{spatial_attention_forward.1} parent=0 // pred_region
    _
  $region13: #{spatial_attention_forward.1} parent=0 // pred_fallthru
    _
  %v15 = vld [vmem:[%s0] sm:$0xff]
  %v16 = vld [vmem:[%s0 + $0x8] sm:$0xff]
  %v17 = vld [vmem:[%s0 + $0x10] sm:$0xff]
  %v18 = vld [vmem:[%s0 + $0x18] sm:$0xff]
  %v19 = vld [vmem:[%s0 + $0x20] sm:$0xff]
  %v20 = vld [vmem:[%s0 + $0x28] sm:$0xff]
  %v21 = vld [vmem:[%s0 + $0x30] sm:$0xff]
  %v22 = vld [vmem:[%s0 + $0x38] sm:$0xff]
  %v23 = vld [vmem:[%s0 + $0x40] sm:$0xff]
  %v24 = vld [vmem:[%s0 + $0x48] sm:$0xff]
  %v25 = vld [vmem:[%s0 + $0x50] sm:$0xff]
  %v26 = vld [vmem:[%s0 + $0x58] sm:$0xff]
  %v27 = vld [vmem:[%s0 + $0x60] sm:$0xff]
  %v28 = vld [vmem:[%s0 + $0x68] sm:$0xff]
  %v29 = vld [vmem:[%s0 + $0x70] sm:$0xff]
  %v30 = vld [vmem:[%s0 + $0x78] sm:$0xff]
  %v31 = vmax.f32 %v15, %v17
  %v32 = vmax.f32 %v31, %v19
  %v33 = vmax.f32 %v32, %v21
  %v34 = vrot.slane %v33, 4
  %v35 = vmax.f32 %v33, %v34
  %v36 = vrot.slane %v35, 2
  %v37 = vmax.f32 %v35, %v36
  %v38 = vrot.slane %v37, 1
  %v39 = vmax.f32 %v37, %v38
  %v40 = vmax.f32 %v16, %v18
  %v41 = vmax.f32 %v40, %v20
  %v42 = vmax.f32 %v41, %v22
  %v43 = vrot.slane %v42, 4
  %v44 = vmax.f32 %v42, %v43
  %v45 = vrot.slane %v44, 2
  %v46 = vmax.f32 %v44, %v45
  %v47 = vrot.slane %v46, 1
  %v48 = vmax.f32 %v46, %v47
  %v49 = vmax.f32 %v23, %v25
  %v50 = vmax.f32 %v49, %v27
  %v51 = vmax.f32 %v50, %v29
  %v52 = vrot.slane %v51, 4
  %v53 = vmax.f32 %v51, %v52
  %v54 = vrot.slane %v53, 2
  %v55 = vmax.f32 %v53, %v54
  %v56 = vrot.slane %v55, 1
  %v57 = vmax.f32 %v55, %v56
  %v58 = vmax.f32 %v24, %v26
  %v59 = vmax.f32 %v58, %v28
  %v60 = vmax.f32 %v59, %v30
  %v61 = vrot.slane %v60, 4
  %v62 = vmax.f32 %v60, %v61
  %v63 = vrot.slane %v62, 2
  %v64 = vmax.f32 %v62, %v63
  %v65 = vrot.slane %v64, 1
  %v66 = vmax.f32 %v64, %v65
  %v67 = vadd.f32 %v15, %v17
  %v68 = vadd.f32 %v67, %v19
  %v69 = vadd.f32 %v68, %v21
  %v70 = vrot.slane %v69, 4
  %v71 = vadd.f32 %v69, %v70
  %v72 = vrot.slane %v71, 2
  %v73 = vadd.f32 %v71, %v72
  %v74 = vrot.slane %v73, 1
  %v75 = vadd.f32 %v73, %v74
  %v76 = vadd.f32 %v16, %v18
  %v77 = vadd.f32 %v76, %v20
  %v78 = vadd.f32 %v77, %v22
  %v79 = vrot.slane %v78, 4
  %v80 = vadd.f32 %v78, %v79
  %v81 = vrot.slane %v80, 2
  %v82 = vadd.f32 %v80, %v81
  %v83 = vrot.slane %v82, 1
  %v84 = vadd.f32 %v82, %v83
  %v85 = vadd.f32 %v23, %v25
  %v86 = vadd.f32 %v85, %v27
  %v87 = vadd.f32 %v86, %v29
  %v88 = vrot.slane %v87, 4
  %v89 = vadd.f32 %v87, %v88
  %v90 = vrot.slane %v89, 2
  %v91 = vadd.f32 %v89, %v90
  %v92 = vrot.slane %v91, 1
  %v93 = vadd.f32 %v91, %v92
  %v94 = vadd.f32 %v24, %v26
  %v95 = vadd.f32 %v94, %v28
  %v96 = vadd.f32 %v95, %v30
  %v97 = vrot.slane %v96, 4
  %v98 = vadd.f32 %v96, %v97
  %v99 = vrot.slane %v98, 2
  %v100 = vadd.f32 %v98, %v99
  %v101 = vrot.slane %v100, 1
  %v102 = vadd.f32 %v100, %v101
  %v103 = vrcp.pop 32.0
  %v104 = vmul.f32 %v75, %v103
  %v105 = vmul.f32 %v84, %v103
  %v106 = vmul.f32 %v93, %v103
  %v107 = vmul.f32 %v102, %v103
  %vm112 = vcmask 1041409
  %v113 = vsel %vm112, %v57, %v39
  %v114 = vsel %vm112, %v66, %v48
  %v121 = vsel %vm112, %v106, %v104
  %v122 = vsel %vm112, %v107, %v105
  %vm125 = vcmask 1041408
  %v126 = vsel %vm125, %v113, 0.0
  %v127 = vsel %vm125, %v114, 0.0
  %v128 = vsel %vm125, %v121, 0.0
  %v129 = vsel %vm125, %v122, 0.0
  %v130 = vpack.c.bf16 %v126, %v126
  %v131 = vpack.c.bf16 %v127, %v127
  %v132 = vpack.c.bf16 %v128, %v128
  %v133 = vpack.c.bf16 %v129, %v129
  %v134 = vld [vmem:[%s1] sm:$0xff]
  %v135 = vld [vmem:[%s1 + $0x8] sm:$0xff]
  %v136 = vld [vmem:[%s1 + $0x10] sm:$0xff]
  %v137 = vld [vmem:[%s1 + $0x18] sm:$0xff]
  %v138 = vld [vmem:[%s1 + $0x20] sm:$0xff]
  %v139 = vld [vmem:[%s1 + $0x28] sm:$0xff]
  %v140 = vld [vmem:[%s1 + $0x30] sm:$0xff]
  %v141 = vld [vmem:[%s1 + $0x38] sm:$0xff]
  %v142 = vld [vmem:[%s1 + $0x40] sm:$0xff]
  %v143 = vld [vmem:[%s1 + $0x48] sm:$0xff]
  %v144 = vld [vmem:[%s1 + $0x50] sm:$0xff]
  %v145 = vld [vmem:[%s1 + $0x58] sm:$0xff]
  %v146 = vld [vmem:[%s1 + $0x60] sm:$0xff]
  %v147 = vld [vmem:[%s1 + $0x68] sm:$0xff]
  %v148 = vld [vmem:[%s1 + $0x70] sm:$0xff]
  %v149 = vld [vmem:[%s1 + $0x78] sm:$0xff]
  %v150 = vld [vmem:[%s1 + $0x80] sm:$0xff]
  %v151 = vld [vmem:[%s1 + $0x88] sm:$0xff]
  %v152 = vld [vmem:[%s1 + $0x90] sm:$0xff]
  %v153 = vld [vmem:[%s1 + $0x98] sm:$0xff]
  %v154 = vld [vmem:[%s1 + $0xa0] sm:$0xff]
  %v155 = vld [vmem:[%s1 + $0xa8] sm:$0xff]
  %v156 = vld [vmem:[%s1 + $0xb0] sm:$0xff]
  %v157 = vld [vmem:[%s1 + $0xb8] sm:$0xff]
  %v158 = vld [vmem:[%s1 + $0xc0] sm:$0xff]
  %v159 = vld [vmem:[%s1 + $0xc8] sm:$0xff]
  %v160 = vld [vmem:[%s1 + $0xd0] sm:$0xff]
  %v161 = vld [vmem:[%s1 + $0xd8] sm:$0xff]
  %v162 = vld [vmem:[%s1 + $0xe0] sm:$0xff]
  %v163 = vld [vmem:[%s1 + $0xe8] sm:$0xff]
  %v164 = vld [vmem:[%s1 + $0xf0] sm:$0xff]
  %v165 = vld [vmem:[%s1 + $0xf8] sm:$0xff]
  %v166 = vld [vmem:[%s1 + $0x100] sm:$0xff]
  %v167 = vld [vmem:[%s1 + $0x108] sm:$0xff]
  %v168 = vld [vmem:[%s1 + $0x110] sm:$0xff]
  %v169 = vld [vmem:[%s1 + $0x118] sm:$0xff]
  %v170 = vld [vmem:[%s1 + $0x120] sm:$0xff]
  %v171 = vld [vmem:[%s1 + $0x128] sm:$0xff]
  %v172 = vld [vmem:[%s1 + $0x130] sm:$0xff]
  %v173 = vld [vmem:[%s1 + $0x138] sm:$0xff]
  %v174 = vld [vmem:[%s1 + $0x140] sm:$0xff]
  %v175 = vld [vmem:[%s1 + $0x148] sm:$0xff]
  %v176 = vld [vmem:[%s1 + $0x150] sm:$0xff]
  %v177 = vld [vmem:[%s1 + $0x158] sm:$0xff]
  %v178 = vld [vmem:[%s1 + $0x160] sm:$0xff]
  %v179 = vld [vmem:[%s1 + $0x168] sm:$0xff]
  %v180 = vld [vmem:[%s1 + $0x170] sm:$0xff]
  %v181 = vld [vmem:[%s1 + $0x178] sm:$0xff]
  %v182 = vld [vmem:[%s1 + $0x180] sm:$0xff]
  %v183 = vld [vmem:[%s1 + $0x188] sm:$0xff]
  %v184 = vld [vmem:[%s1 + $0x190] sm:$0xff]
  %v185 = vld [vmem:[%s1 + $0x198] sm:$0xff]
  %v186 = vld [vmem:[%s1 + $0x1a0] sm:$0xff]
  %v187 = vld [vmem:[%s1 + $0x1a8] sm:$0xff]
  %v188 = vld [vmem:[%s1 + $0x1b0] sm:$0xff]
  %v189 = vld [vmem:[%s1 + $0x1b8] sm:$0xff]
  %v190 = vld [vmem:[%s1 + $0x1c0] sm:$0xff]
  %v191 = vld [vmem:[%s1 + $0x1c8] sm:$0xff]
  %v192 = vld [vmem:[%s1 + $0x1d0] sm:$0xff]
  %v193 = vld [vmem:[%s1 + $0x1d8] sm:$0xff]
  %v194 = vld [vmem:[%s1 + $0x1e0] sm:$0xff]
  %v195 = vld [vmem:[%s1 + $0x1e8] sm:$0xff]
  %v196 = vld [vmem:[%s1 + $0x1f0] sm:$0xff]
  %v197 = vld [vmem:[%s1 + $0x1f8] sm:$0xff]
  %v262 = vunpack.c.l.b16 %v134
  %v263 = vunpack.c.h.b16 %v134
  %v264 = vunpack.c.l.b16 %v135
  %v265 = vunpack.c.h.b16 %v135
  %v266 = vunpack.c.l.b16 %v136
  %v267 = vunpack.c.h.b16 %v136
  %v268 = vunpack.c.l.b16 %v137
  %v269 = vunpack.c.h.b16 %v137
  %v270 = vunpack.c.l.b16 %v138
  %v271 = vunpack.c.h.b16 %v138
  %v272 = vunpack.c.l.b16 %v139
  %v273 = vunpack.c.h.b16 %v139
  %v274 = vunpack.c.l.b16 %v140
  %v275 = vunpack.c.h.b16 %v140
  %v276 = vunpack.c.l.b16 %v141
  %v277 = vunpack.c.h.b16 %v141
  %v278 = vunpack.c.l.b16 %v142
  %v279 = vunpack.c.h.b16 %v142
  %v280 = vunpack.c.l.b16 %v143
  %v281 = vunpack.c.h.b16 %v143
  %v282 = vunpack.c.l.b16 %v144
  %v283 = vunpack.c.h.b16 %v144
  %v284 = vunpack.c.l.b16 %v145
  %v285 = vunpack.c.h.b16 %v145
  %v286 = vunpack.c.l.b16 %v146
  %v287 = vunpack.c.h.b16 %v146
  %v288 = vunpack.c.l.b16 %v147
  %v289 = vunpack.c.h.b16 %v147
  %v290 = vunpack.c.l.b16 %v148
  %v291 = vunpack.c.h.b16 %v148
  %v292 = vunpack.c.l.b16 %v149
  %v293 = vunpack.c.h.b16 %v149
  %v294 = vunpack.c.l.b16 %v150
  %v295 = vunpack.c.h.b16 %v150
  %v296 = vunpack.c.l.b16 %v151
  %v297 = vunpack.c.h.b16 %v151
  %v298 = vunpack.c.l.b16 %v152
  %v299 = vunpack.c.h.b16 %v152
  %v300 = vunpack.c.l.b16 %v153
  %v301 = vunpack.c.h.b16 %v153
  %v302 = vunpack.c.l.b16 %v154
  %v303 = vunpack.c.h.b16 %v154
  %v304 = vunpack.c.l.b16 %v155
  %v305 = vunpack.c.h.b16 %v155
  %v306 = vunpack.c.l.b16 %v156
  %v307 = vunpack.c.h.b16 %v156
  %v308 = vunpack.c.l.b16 %v157
  %v309 = vunpack.c.h.b16 %v157
  %v310 = vunpack.c.l.b16 %v158
  %v311 = vunpack.c.h.b16 %v158
  %v312 = vunpack.c.l.b16 %v159
  %v313 = vunpack.c.h.b16 %v159
  %v314 = vunpack.c.l.b16 %v160
  %v315 = vunpack.c.h.b16 %v160
  %v316 = vunpack.c.l.b16 %v161
  %v317 = vunpack.c.h.b16 %v161
  %v318 = vunpack.c.l.b16 %v162
  %v319 = vunpack.c.h.b16 %v162
  %v320 = vunpack.c.l.b16 %v163
  %v321 = vunpack.c.h.b16 %v163
  %v322 = vunpack.c.l.b16 %v164
  %v323 = vunpack.c.h.b16 %v164
  %v324 = vunpack.c.l.b16 %v165
  %v325 = vunpack.c.h.b16 %v165
  %v326 = vunpack.c.l.b16 %v166
  %v327 = vunpack.c.h.b16 %v166
  %v328 = vunpack.c.l.b16 %v167
  %v329 = vunpack.c.h.b16 %v167
  %v330 = vunpack.c.l.b16 %v168
  %v331 = vunpack.c.h.b16 %v168
  %v332 = vunpack.c.l.b16 %v169
  %v333 = vunpack.c.h.b16 %v169
  %v334 = vunpack.c.l.b16 %v170
  %v335 = vunpack.c.h.b16 %v170
  %v336 = vunpack.c.l.b16 %v171
  %v337 = vunpack.c.h.b16 %v171
  %v338 = vunpack.c.l.b16 %v172
  %v339 = vunpack.c.h.b16 %v172
  %v340 = vunpack.c.l.b16 %v173
  %v341 = vunpack.c.h.b16 %v173
  %v342 = vunpack.c.l.b16 %v174
  %v343 = vunpack.c.h.b16 %v174
  %v344 = vunpack.c.l.b16 %v175
  %v345 = vunpack.c.h.b16 %v175
  %v346 = vunpack.c.l.b16 %v176
  %v347 = vunpack.c.h.b16 %v176
  %v348 = vunpack.c.l.b16 %v177
  %v349 = vunpack.c.h.b16 %v177
  %v350 = vunpack.c.l.b16 %v178
  %v351 = vunpack.c.h.b16 %v178
  %v352 = vunpack.c.l.b16 %v179
  %v353 = vunpack.c.h.b16 %v179
  %v354 = vunpack.c.l.b16 %v180
  %v355 = vunpack.c.h.b16 %v180
  %v356 = vunpack.c.l.b16 %v181
  %v357 = vunpack.c.h.b16 %v181
  %v358 = vunpack.c.l.b16 %v182
  %v359 = vunpack.c.h.b16 %v182
  %v360 = vunpack.c.l.b16 %v183
  %v361 = vunpack.c.h.b16 %v183
  %v362 = vunpack.c.l.b16 %v184
  %v363 = vunpack.c.h.b16 %v184
  %v364 = vunpack.c.l.b16 %v185
  %v365 = vunpack.c.h.b16 %v185
  %v366 = vunpack.c.l.b16 %v186
  %v367 = vunpack.c.h.b16 %v186
  %v368 = vunpack.c.l.b16 %v187
  %v369 = vunpack.c.h.b16 %v187
  %v370 = vunpack.c.l.b16 %v188
  %v371 = vunpack.c.h.b16 %v188
  %v372 = vunpack.c.l.b16 %v189
  %v373 = vunpack.c.h.b16 %v189
  %v374 = vunpack.c.l.b16 %v190
  %v375 = vunpack.c.h.b16 %v190
  %v376 = vunpack.c.l.b16 %v191
  %v377 = vunpack.c.h.b16 %v191
  %v378 = vunpack.c.l.b16 %v192
  %v379 = vunpack.c.h.b16 %v192
  %v380 = vunpack.c.l.b16 %v193
  %v381 = vunpack.c.h.b16 %v193
  %v382 = vunpack.c.l.b16 %v194
  %v383 = vunpack.c.h.b16 %v194
  %v384 = vunpack.c.l.b16 %v195
  %v385 = vunpack.c.h.b16 %v195
  %v386 = vunpack.c.l.b16 %v196
  %v387 = vunpack.c.h.b16 %v196
  %v388 = vunpack.c.l.b16 %v197
  %v389 = vunpack.c.h.b16 %v197
  %v390 = vpack.c.b16 %v264, %v262
  %v391 = vpack.c.b16 %v265, %v263
  %v392 = vpack.c.b16 %v268, %v266
  %v393 = vpack.c.b16 %v269, %v267
  %v394 = vpack.c.b16 %v272, %v270
  %v395 = vpack.c.b16 %v273, %v271
  %v396 = vpack.c.b16 %v276, %v274
  %v397 = vpack.c.b16 %v277, %v275
  %v398 = vpack.c.b16 %v280, %v278
  %v399 = vpack.c.b16 %v281, %v279
  %v400 = vpack.c.b16 %v284, %v282
  %v401 = vpack.c.b16 %v285, %v283
  %v402 = vpack.c.b16 %v288, %v286
  %v403 = vpack.c.b16 %v289, %v287
  %v404 = vpack.c.b16 %v292, %v290
  %v405 = vpack.c.b16 %v293, %v291
  %v406 = vpack.c.b16 %v296, %v294
  %v407 = vpack.c.b16 %v297, %v295
  %v408 = vpack.c.b16 %v300, %v298
  %v409 = vpack.c.b16 %v301, %v299
  %v410 = vpack.c.b16 %v304, %v302
  %v411 = vpack.c.b16 %v305, %v303
  %v412 = vpack.c.b16 %v308, %v306
  %v413 = vpack.c.b16 %v309, %v307
  %v414 = vpack.c.b16 %v312, %v310
  %v415 = vpack.c.b16 %v313, %v311
  %v416 = vpack.c.b16 %v316, %v314
  %v417 = vpack.c.b16 %v317, %v315
  %v418 = vpack.c.b16 %v320, %v318
  %v419 = vpack.c.b16 %v321, %v319
  %v420 = vpack.c.b16 %v324, %v322
  %v421 = vpack.c.b16 %v325, %v323
  %v422 = vpack.c.b16 %v328, %v326
  %v423 = vpack.c.b16 %v329, %v327
  %v424 = vpack.c.b16 %v332, %v330
  %v425 = vpack.c.b16 %v333, %v331
  %v426 = vpack.c.b16 %v336, %v334
  %v427 = vpack.c.b16 %v337, %v335
  %v428 = vpack.c.b16 %v340, %v338
  %v429 = vpack.c.b16 %v341, %v339
  %v430 = vpack.c.b16 %v344, %v342
  %v431 = vpack.c.b16 %v345, %v343
  %v432 = vpack.c.b16 %v348, %v346
  %v433 = vpack.c.b16 %v349, %v347
  %v434 = vpack.c.b16 %v352, %v350
  %v435 = vpack.c.b16 %v353, %v351
  %v436 = vpack.c.b16 %v356, %v354
  %v437 = vpack.c.b16 %v357, %v355
  %v438 = vpack.c.b16 %v360, %v358
  %v439 = vpack.c.b16 %v361, %v359
  %v440 = vpack.c.b16 %v364, %v362
  %v441 = vpack.c.b16 %v365, %v363
  %v442 = vpack.c.b16 %v368, %v366
  %v443 = vpack.c.b16 %v369, %v367
  %v444 = vpack.c.b16 %v372, %v370
  %v445 = vpack.c.b16 %v373, %v371
  %v446 = vpack.c.b16 %v376, %v374
  %v447 = vpack.c.b16 %v377, %v375
  %v448 = vpack.c.b16 %v380, %v378
  %v449 = vpack.c.b16 %v381, %v379
  %v450 = vpack.c.b16 %v384, %v382
  %v451 = vpack.c.b16 %v385, %v383
  %v452 = vpack.c.b16 %v388, %v386
  %v453 = vpack.c.b16 %v389, %v387
  %518 = vmatprep.subr.bf16.mxu0 %v391
  %519 = vmatpush1.bf16.msra.mxu0 %v390
  %520 = vmatprep.subr.bf16.mxu0 %v393
  %521 = vmatpush1.bf16.msra.mxu0 %v392
  %522 = vmatprep.subr.bf16.mxu0 %v395
  %523 = vmatpush1.bf16.msra.mxu0 %v394
  %524 = vmatprep.subr.bf16.mxu0 %v397
  %525 = vmatpush1.bf16.msra.mxu0 %v396
  %526 = vmatprep.subr.bf16.mxu0 %v399
  %527 = vmatpush1.bf16.msra.mxu0 %v398
  %528 = vmatprep.subr.bf16.mxu0 %v401
  %529 = vmatpush1.bf16.msra.mxu0 %v400
  %530 = vmatprep.subr.bf16.mxu0 %v403
  %531 = vmatpush1.bf16.msra.mxu0 %v402
  %532 = vmatprep.subr.bf16.mxu0 %v405
  %533 = vmatpush1.bf16.msra.mxu0 %v404
  %534 = vmatprep.subr.bf16.mxu0 %v407
  %535 = vmatpush1.bf16.msra.mxu0 %v406
  %536 = vmatprep.subr.bf16.mxu0 %v409
  %537 = vmatpush1.bf16.msra.mxu0 %v408
  %538 = vmatprep.subr.bf16.mxu0 %v411
  %539 = vmatpush1.bf16.msra.mxu0 %v410
  %540 = vmatprep.subr.bf16.mxu0 %v413
  %541 = vmatpush1.bf16.msra.mxu0 %v412
  %542 = vmatprep.subr.bf16.mxu0 %v415
  %543 = vmatpush1.bf16.msra.mxu0 %v414
  %544 = vmatprep.subr.bf16.mxu0 %v417
  %545 = vmatpush1.bf16.msra.mxu0 %v416
  %546 = vmatprep.subr.bf16.mxu0 %v419
  %547 = vmatpush1.bf16.msra.mxu0 %v418
  %548 = vmatprep.subr.bf16.mxu0 %v421
  %549 = vmatpush1.bf16.msra.mxu0 %v420
  %550 = vmatprep.mubr.bf16.mxu0 %v131
  %551 = vmatmul.mubr.bf16.gmra.mrb[0].mxu0 %v130
  %v552 = vpop.f32.mrb[0].mxu0
  %v553 = vadd.f32 0.0, %v552
  %v554 = vpop.f32.mrb[0].mxu0
  %v555 = vadd.f32 0.0, %v554
  %v556 = vpop.f32.mrb[0].mxu0
  %v557 = vpop.f32.mrb[0].mxu0
  %558 = vdwg.mxu0
  %559 = vmatprep.subr.bf16.mxu0 %v423
  %560 = vmatpush1.bf16.msra.mxu0 %v422
  %561 = vmatprep.subr.bf16.mxu0 %v425
  %562 = vmatpush1.bf16.msra.mxu0 %v424
  %563 = vmatprep.subr.bf16.mxu0 %v427
  %564 = vmatpush1.bf16.msra.mxu0 %v426
  %565 = vmatprep.subr.bf16.mxu0 %v429
  %566 = vmatpush1.bf16.msra.mxu0 %v428
  %567 = vmatprep.subr.bf16.mxu0 %v431
  %568 = vmatpush1.bf16.msra.mxu0 %v430
  %569 = vmatprep.subr.bf16.mxu0 %v433
  %570 = vmatpush1.bf16.msra.mxu0 %v432
  %571 = vmatprep.subr.bf16.mxu0 %v435
  %572 = vmatpush1.bf16.msra.mxu0 %v434
  %573 = vmatprep.subr.bf16.mxu0 %v437
  %574 = vmatpush1.bf16.msra.mxu0 %v436
  %575 = vmatprep.subr.bf16.mxu0 %v439
  %576 = vmatpush1.bf16.msra.mxu0 %v438
  %577 = vmatprep.subr.bf16.mxu0 %v441
  %578 = vmatpush1.bf16.msra.mxu0 %v440
  %579 = vmatprep.subr.bf16.mxu0 %v443
  %580 = vmatpush1.bf16.msra.mxu0 %v442
  %581 = vmatprep.subr.bf16.mxu0 %v445
  %582 = vmatpush1.bf16.msra.mxu0 %v444
  %583 = vmatprep.subr.bf16.mxu0 %v447
  %584 = vmatpush1.bf16.msra.mxu0 %v446
  %585 = vmatprep.subr.bf16.mxu0 %v449
  %586 = vmatpush1.bf16.msra.mxu0 %v448
  %587 = vmatprep.subr.bf16.mxu0 %v451
  %588 = vmatpush1.bf16.msra.mxu0 %v450
  %589 = vmatprep.subr.bf16.mxu0 %v453
  %590 = vmatpush1.bf16.msra.mxu0 %v452
  %591 = vmatprep.mubr.bf16.mxu0 %v133
  %592 = vmatmul.mubr.bf16.gmra.mrb[0].mxu0 %v132
  %v593 = vpop.f32.mrb[0].mxu0
  %v594 = vadd.f32 %v553, %v593
  %v595 = vpop.f32.mrb[0].mxu0
  %v596 = vadd.f32 %v555, %v595
  %v597 = vpop.f32.mrb[0].mxu0
  %v598 = vpop.f32.mrb[0].mxu0
  %599 = vdwg.mxu0
  %s600 = sld [smem:[#allocation2]]
  %v601 = vstv %s600
  %v602 = vadd.f32 %v594, %v601
  %v603 = vadd.f32 %v596, %v601
  %v604 = vxor.u32 %v602, 2147483648
  %v605 = vxor.u32 %v603, 2147483648
  %v606 = vmul.f32 %v604, 1.442695
  %v607 = vpow.pop %v606
  %v608 = vmul.f32 %v605, 1.442695
  %v609 = vpow.pop %v608
  %v610 = vadd.f32 %v607, 1.0
  %v611 = vadd.f32 %v609, 1.0
  %v612 = vrcp.pop %v610
  %v613 = vmul.f32 1.0, %v612
  %v614 = vrcp.pop %v611
  %v615 = vmul.f32 1.0, %v614
  %v618 = vcombine.low %v613, %v615
  %v620 = vunpack.c.l.s4 1983009808
  %v621 = vunpack.c.0.s8 %v620
  %v622 = vlaneseq
  %v623 = vshrl.u32 %v622, 7
  %v624 = vsub.s32 %v621, %v623
  %v625 = vrot.slane %v618, %v624
  %627 = vst [vmem:[%s3] sm:$0xf] %v625
  // Predicated region
  $region14: #{spatial_attention_forward.1} parent=0 // pred_check
    _
  $region15: #{spatial_attention_forward.1} parent=0 // pred_check_branch
    %629 = sbr.rel (0) target = $region17
  $region16: #{spatial_attention_forward.1} parent=0 // pred_region
    _
  $region17: #{spatial_attention_forward.1} parent=0 // pred_fallthru
    _
  // Predicated region
  $region18: #{spatial_attention_forward.1} parent=0 // pred_check
    _
  $region19: #{spatial_attention_forward.1} parent=0 // pred_check_branch
    %631 = sbr.rel (0) target = $region21
  $region20: #{spatial_attention_forward.1} parent=0 // pred_region
    _
  $region21: #{spatial_attention_forward.1} parent=0 // pred_fallthru
    _

</llo_original>
